<compile_context>
chip_gen: v7x
topology: tpu7x:2x2x1
jax: 0.10.0
libtpu: 0.0.40
codegen_flags: <defaults>
</compile_context>

<pallas_src>
import functools
import math

import jax
import jax.numpy as jnp
import numpy as np
from jax import lax
from jax.experimental import pallas as pl
from jax.experimental.pallas import tpu as pltpu


def _round_up(a: int, b: int) -> int:
    return (a + b - 1) // b * b


def _cdiv(a: int, b: int) -> int:
    return (a + b - 1) // b


def _realnvp_kernel(x_ref, o_ref, ssq_acc, ld_acc, *,
                    alpha, row_const, n_chunks, tile_d, d_total, needs_mask):
    """One (tile_b, tile_d) tile: accumulate sum(z^2) and sum(-log x' - log(1-x'))."""
    k = pl.program_id(1)

    @pl.when(k == 0)
    def _init():
        ssq_acc[...] = jnp.zeros_like(ssq_acc)
        ld_acc[...] = jnp.zeros_like(ld_acc)

    scale = jnp.float32(1.0 - alpha)
    shift = jnp.float32(0.5 * alpha)
    tile_b = x_ref.shape[0]

    if needs_mask:
        # Hoisted once per invocation (JAX does not CSE broadcast_in_dim).
        lane_iota = lax.broadcasted_iota(jnp.int32, (tile_b, 128), 1)
        col0 = k * tile_d  # scalar

    def chunk(start, ssq, ld):
        # 128-lane chunk: 1 input load, ~8 VALU ops, 2 EUP logs per vreg.
        xc = x_ref[:, pl.ds(start, 128)].astype(jnp.float32)
        xp = xc * scale + shift
        if needs_mask:
            # Padded lanes -> x' = 0.5 so z = 0; their 2*log(2) log-det
            # contribution is cancelled inside row_const.
            xp = jnp.where(lane_iota < (d_total - col0 - start), xp,
                           jnp.float32(0.5))
        lx = jnp.log(xp)
        l1x = jnp.log(1.0 - xp)      # 1 - x' >= alpha/2 > 0: no cancellation
        z = lx - l1x
        return ssq + z * z, ld - (lx + l1x)

    # Hoisted accumulators: at tile_b <= 128 each is <= 16 vregs, so both fit
    # the register file across the chunk loop (no VMEM spill round-trips).
    ssq = ssq_acc[...]
    ld = ld_acc[...]
    if n_chunks <= 16:
        # Short fixed trip count: full static unroll (scheduler visibility).
        for c in range(n_chunks):
            ssq, ld = chunk(c * 128, ssq, ld)
    else:
        unroll = 4 if n_chunks % 4 == 0 else (2 if n_chunks % 2 == 0 else 1)

        def body(c, carry):
            s, l = carry
            start = pl.multiple_of(c * 128, 128)
            return chunk(start, s, l)

        ssq, ld = lax.fori_loop(0, n_chunks, body, (ssq, ld), unroll=unroll)

    ssq_acc[...] = ssq
    ld_acc[...] = ld

    @pl.when(k == pl.num_programs(1) - 1)
    def _finalize():
        # Single cross-lane (XLU) reduce per row-block; per-element constants
        # (D*log(1-alpha), -0.5*D*log(2*pi), lane-padding correction) folded
        # into one compile-time scalar added once per row.
        row_ssq = jnp.sum(ssq, axis=-1, keepdims=True)   # (tile_b, 1)
        row_ld = jnp.sum(ld, axis=-1, keepdims=True)     # (tile_b, 1)
        logp = -0.5 * row_ssq + row_ld + jnp.float32(row_const)
        # Lane-dense store (unmasked vst of full vregs); wrapper slices col 0.
        o_ref[...] = jnp.broadcast_to(logp, o_ref.shape)


def realnvp_log_prob(x, alpha=0.05, *, max_tile_b=128,
                     target_block_bytes=4 << 20):
    """log_prob of RealNVP (empty coupling list) for x of shape [B, C, H, W]."""
    B = x.shape[0]
    D = int(np.prod(x.shape[1:]))
    x2d = x.reshape(B, D)            # pure row-major reshape (no copy)
    itemsize = jnp.dtype(x2d.dtype).itemsize

    # Sub-32-bit dtypes pack along sublanes -> larger row alignment.
    row_align = max(8, 32 // itemsize)

    # Row tiling: cap at 128 (accumulator vreg footprint) and target >= 2 row
    # blocks when B allows so the 'parallel' axis feeds both TCs on v7x.
    if B <= row_align:
        tile_b = B                   # block dim equals full array dim -> valid
    else:
        tile_b = min(max_tile_b, _round_up(_cdiv(B, 2), row_align))
    grid_i = _cdiv(B, tile_b)

    # D tiling: ~2-4 MiB blocks; double-buffered input stays under the default
    # scoped-VMEM limits on v5e (16 MiB), v6e/v7x (32 MiB).  No jnp.pad: any
    # lane padding (< tile_d per row) is masked in-kernel; garbage rows in a
    # partial row block never leave the kernel.
    d_lanes = _round_up(D, 128)
    target_tile_d = max(128, (target_block_bytes // max(1, tile_b * itemsize))
                        // 128 * 128)
    grid_k = _cdiv(d_lanes, target_tile_d)
    tile_d = _round_up(_cdiv(d_lanes, grid_k), 128)
    grid_k = _cdiv(D, tile_d)
    pad_lanes = grid_k * tile_d - D
    needs_mask = pad_lanes > 0
    n_chunks = tile_d // 128

    row_const = (D * math.log(1.0 - alpha)
                 - 0.5 * D * math.log(2.0 * math.pi)
                 - pad_lanes * 2.0 * math.log(2.0))

    kernel = functools.partial(
        _realnvp_kernel,
        alpha=float(alpha),
        row_const=float(row_const),
        n_chunks=n_chunks,
        tile_d=tile_d,
        d_total=D,
        needs_mask=needs_mask,
    )

    out = pl.pallas_call(
        kernel,
        out_shape=jax.ShapeDtypeStruct((B, 128), jnp.float32),
        grid_spec=pltpu.PrefetchScalarGridSpec(
            num_scalar_prefetch=0,
            grid=(grid_i, grid_k),
            in_specs=[pl.BlockSpec((tile_b, tile_d), lambda i, k: (i, k))],
            out_specs=pl.BlockSpec((tile_b, 128), lambda i, k: (i, 0)),
            scratch_shapes=[pltpu.VMEM((tile_b, 128), jnp.float32),
                            pltpu.VMEM((tile_b, 128), jnp.float32)],
        ),
        compiler_params=pltpu.CompilerParams(
            # batch axis parallel (both TCs on v7x), reduction axis arbitrary
            # (carries the VMEM accumulators).
            dimension_semantics=("parallel", "arbitrary")),
        cost_estimate=pl.CostEstimate(
            flops=int(8 * B * D),
            transcendentals=int(2 * B * D),
            bytes_accessed=int(B * D * itemsize + B * 128 * 4)),
    )(x2d)
    return out[:B, 0]


def realnvp_log_prob_ref(x, alpha=0.05):
    """Pure-JAX reference matching the PyTorch RealNVP.log_prob (empty modules_)."""
    B = x.shape[0]
    D = int(np.prod(x.shape[1:]))
    xf = x.reshape(B, D).astype(jnp.float32)
    xp = xf * (1.0 - alpha) + 0.5 * alpha
    log_det = jnp.sum(-jnp.log(xp) - jnp.log(1.0 - xp) + np.log(1.0 - alpha), axis=1)
    z = jnp.log(xp) - jnp.log(1.0 - xp)
    return -0.5 * jnp.sum(z * z, axis=1) - 0.5 * D * np.log(2.0 * np.pi) + log_det


if __name__ == "__main__":
    key = jax.random.PRNGKey(0)
    B, C, H, W = 2, 4, 16, 16          # dim = C*H*W = 1024
    x = jax.random.uniform(key, (B, C, H, W), dtype=jnp.float32,
                           minval=0.0, maxval=1.0)

    logp = jax.jit(realnvp_log_prob)(x)
    logp = jax.block_until_ready(logp)

    ref = realnvp_log_prob_ref(x)
    np.testing.assert_allclose(np.asarray(logp), np.asarray(ref),
                               rtol=2e-4, atol=1e-2)

    print("KERNEL_OK")
</pallas_src>

<mosaic_0001>
module attributes {stable_mosaic.version = 11 : i64} {
  func.func @_realnvp_kernel(%arg0: i32, %arg1: i32, %arg2: memref<2x1024xf32, #tpu.memory_space<vmem>>, %arg3: memref<2x128xf32, #tpu.memory_space<vmem>>, %arg4: memref<2x128xf32, #tpu.memory_space<vmem>>, %arg5: memref<2x128xf32, #tpu.memory_space<vmem>>) attributes {dimension_semantics = [#tpu.dimension_semantics<parallel>, #tpu.dimension_semantics<arbitrary>], iteration_bounds = array<i64: 1, 1>, scalar_prefetch = 0 : i64, scratch_operands = 2 : i64, tpu.core_type = #tpu.core_type<tc>, window_params = [{transform_indices = @transform_0, window_bounds = array<i64: 2, 1024>}, {transform_indices = @transform_1, window_bounds = array<i64: 2, 128>}]} {
    %c0_i32 = arith.constant 0 : i32
    %0 = arith.cmpi eq, %arg1, %c0_i32 : i32
    %1 = arith.extui %0 : i1 to i32
    %c0_i32_0 = arith.constant 0 : i32
    %2 = arith.cmpi ne, %1, %c0_i32_0 : i32
    scf.if %2 {
      %cst_42 = arith.constant 0.000000e+00 : f32
      %122 = vector.broadcast %cst_42 : f32 to vector<2x128xf32>
      %c0_43 = arith.constant 0 : index
      %c0_44 = arith.constant 0 : index
      %123 = vector.load %arg4[%c0_43, %c0_44] : memref<2x128xf32, #tpu.memory_space<vmem>>, vector<2x128xf32>
      tpu.vector_store %arg4[%c0_43, %c0_44], %122 {strides = array<i32>} : memref<2x128xf32, #tpu.memory_space<vmem>>, vector<2x128xf32>,
      %cst_45 = arith.constant 0.000000e+00 : f32
      %124 = vector.broadcast %cst_45 : f32 to vector<2x128xf32>
      %c0_46 = arith.constant 0 : index
      %c0_47 = arith.constant 0 : index
      %125 = vector.load %arg5[%c0_46, %c0_47] : memref<2x128xf32, #tpu.memory_space<vmem>>, vector<2x128xf32>
      tpu.vector_store %arg5[%c0_46, %c0_47], %124 {strides = array<i32>} : memref<2x128xf32, #tpu.memory_space<vmem>>, vector<2x128xf32>,
    } else {
    }
    %c0 = arith.constant 0 : index
    %c0_1 = arith.constant 0 : index
    %3 = vector.load %arg4[%c0, %c0_1] : memref<2x128xf32, #tpu.memory_space<vmem>>, vector<2x128xf32>
    %c0_2 = arith.constant 0 : index
    %c0_3 = arith.constant 0 : index
    %4 = vector.load %arg5[%c0_2, %c0_3] : memref<2x128xf32, #tpu.memory_space<vmem>>, vector<2x128xf32>
    %c0_4 = arith.constant 0 : index
    %c0_5 = arith.constant 0 : index
    %5 = vector.load %arg2[%c0_4, %c0_5] : memref<2x1024xf32, #tpu.memory_space<vmem>>, vector<2x128xf32>
    %cst = arith.constant 0.949999988 : f32
    %6 = vector.broadcast %cst : f32 to vector<2x128xf32>
    %7 = arith.mulf %5, %6 : vector<2x128xf32>
    %cst_6 = arith.constant 2.500000e-02 : f32
    %8 = vector.broadcast %cst_6 : f32 to vector<2x128xf32>
    %9 = arith.addf %7, %8 : vector<2x128xf32>
    %10 = math.log %9 : vector<2x128xf32>
    %cst_7 = arith.constant 1.000000e+00 : f32
    %11 = vector.broadcast %cst_7 : f32 to vector<2x128xf32>
    %12 = arith.subf %11, %9 : vector<2x128xf32>
    %13 = math.log %12 : vector<2x128xf32>
    %14 = arith.subf %10, %13 : vector<2x128xf32>
    %15 = arith.mulf %14, %14 : vector<2x128xf32>
    %16 = arith.addf %3, %15 : vector<2x128xf32>
    %17 = arith.addf %10, %13 : vector<2x128xf32>
    %18 = arith.subf %4, %17 : vector<2x128xf32>
    %c0_8 = arith.constant 0 : index
    %c128 = arith.constant 128 : index
    %19 = vector.load %arg2[%c0_8, %c128] : memref<2x1024xf32, #tpu.memory_space<vmem>>, vector<2x128xf32>
    %cst_9 = arith.constant 0.949999988 : f32
    %20 = vector.broadcast %cst_9 : f32 to vector<2x128xf32>
    %21 = arith.mulf %19, %20 : vector<2x128xf32>
    %cst_10 = arith.constant 2.500000e-02 : f32
    %22 = vector.broadcast %cst_10 : f32 to vector<2x128xf32>
    %23 = arith.addf %21, %22 : vector<2x128xf32>
    %24 = math.log %23 : vector<2x128xf32>
    %cst_11 = arith.constant 1.000000e+00 : f32
    %25 = vector.broadcast %cst_11 : f32 to vector<2x128xf32>
    %26 = arith.subf %25, %23 : vector<2x128xf32>
    %27 = math.log %26 : vector<2x128xf32>
    %28 = arith.subf %24, %27 : vector<2x128xf32>
    %29 = arith.mulf %28, %28 : vector<2x128xf32>
    %30 = arith.addf %16, %29 : vector<2x128xf32>
    %31 = arith.addf %24, %27 : vector<2x128xf32>
    %32 = arith.subf %18, %31 : vector<2x128xf32>
    %c0_12 = arith.constant 0 : index
    %c256 = arith.constant 256 : index
    %33 = vector.load %arg2[%c0_12, %c256] : memref<2x1024xf32, #tpu.memory_space<vmem>>, vector<2x128xf32>
    %cst_13 = arith.constant 0.949999988 : f32
    %34 = vector.broadcast %cst_13 : f32 to vector<2x128xf32>
    %35 = arith.mulf %33, %34 : vector<2x128xf32>
    %cst_14 = arith.constant 2.500000e-02 : f32
    %36 = vector.broadcast %cst_14 : f32 to vector<2x128xf32>
    %37 = arith.addf %35, %36 : vector<2x128xf32>
    %38 = math.log %37 : vector<2x128xf32>
    %cst_15 = arith.constant 1.000000e+00 : f32
    %39 = vector.broadcast %cst_15 : f32 to vector<2x128xf32>
    %40 = arith.subf %39, %37 : vector<2x128xf32>
    %41 = math.log %40 : vector<2x128xf32>
    %42 = arith.subf %38, %41 : vector<2x128xf32>
    %43 = arith.mulf %42, %42 : vector<2x128xf32>
    %44 = arith.addf %30, %43 : vector<2x128xf32>
    %45 = arith.addf %38, %41 : vector<2x128xf32>
    %46 = arith.subf %32, %45 : vector<2x128xf32>
    %c0_16 = arith.constant 0 : index
    %c384 = arith.constant 384 : index
    %47 = vector.load %arg2[%c0_16, %c384] : memref<2x1024xf32, #tpu.memory_space<vmem>>, vector<2x128xf32>
    %cst_17 = arith.constant 0.949999988 : f32
    %48 = vector.broadcast %cst_17 : f32 to vector<2x128xf32>
    %49 = arith.mulf %47, %48 : vector<2x128xf32>
    %cst_18 = arith.constant 2.500000e-02 : f32
    %50 = vector.broadcast %cst_18 : f32 to vector<2x128xf32>
    %51 = arith.addf %49, %50 : vector<2x128xf32>
    %52 = math.log %51 : vector<2x128xf32>
    %cst_19 = arith.constant 1.000000e+00 : f32
    %53 = vector.broadcast %cst_19 : f32 to vector<2x128xf32>
    %54 = arith.subf %53, %51 : vector<2x128xf32>
    %55 = math.log %54 : vector<2x128xf32>
    %56 = arith.subf %52, %55 : vector<2x128xf32>
    %57 = arith.mulf %56, %56 : vector<2x128xf32>
    %58 = arith.addf %44, %57 : vector<2x128xf32>
    %59 = arith.addf %52, %55 : vector<2x128xf32>
    %60 = arith.subf %46, %59 : vector<2x128xf32>
    %c0_20 = arith.constant 0 : index
    %c512 = arith.constant 512 : index
    %61 = vector.load %arg2[%c0_20, %c512] : memref<2x1024xf32, #tpu.memory_space<vmem>>, vector<2x128xf32>
    %cst_21 = arith.constant 0.949999988 : f32
    %62 = vector.broadcast %cst_21 : f32 to vector<2x128xf32>
    %63 = arith.mulf %61, %62 : vector<2x128xf32>
    %cst_22 = arith.constant 2.500000e-02 : f32
    %64 = vector.broadcast %cst_22 : f32 to vector<2x128xf32>
    %65 = arith.addf %63, %64 : vector<2x128xf32>
    %66 = math.log %65 : vector<2x128xf32>
    %cst_23 = arith.constant 1.000000e+00 : f32
    %67 = vector.broadcast %cst_23 : f32 to vector<2x128xf32>
    %68 = arith.subf %67, %65 : vector<2x128xf32>
    %69 = math.log %68 : vector<2x128xf32>
    %70 = arith.subf %66, %69 : vector<2x128xf32>
    %71 = arith.mulf %70, %70 : vector<2x128xf32>
    %72 = arith.addf %58, %71 : vector<2x128xf32>
    %73 = arith.addf %66, %69 : vector<2x128xf32>
    %74 = arith.subf %60, %73 : vector<2x128xf32>
    %c0_24 = arith.constant 0 : index
    %c640 = arith.constant 640 : index
    %75 = vector.load %arg2[%c0_24, %c640] : memref<2x1024xf32, #tpu.memory_space<vmem>>, vector<2x128xf32>
    %cst_25 = arith.constant 0.949999988 : f32
    %76 = vector.broadcast %cst_25 : f32 to vector<2x128xf32>
    %77 = arith.mulf %75, %76 : vector<2x128xf32>
    %cst_26 = arith.constant 2.500000e-02 : f32
    %78 = vector.broadcast %cst_26 : f32 to vector<2x128xf32>
    %79 = arith.addf %77, %78 : vector<2x128xf32>
    %80 = math.log %79 : vector<2x128xf32>
    %cst_27 = arith.constant 1.000000e+00 : f32
    %81 = vector.broadcast %cst_27 : f32 to vector<2x128xf32>
    %82 = arith.subf %81, %79 : vector<2x128xf32>
    %83 = math.log %82 : vector<2x128xf32>
    %84 = arith.subf %80, %83 : vector<2x128xf32>
    %85 = arith.mulf %84, %84 : vector<2x128xf32>
    %86 = arith.addf %72, %85 : vector<2x128xf32>
    %87 = arith.addf %80, %83 : vector<2x128xf32>
    %88 = arith.subf %74, %87 : vector<2x128xf32>
    %c0_28 = arith.constant 0 : index
    %c768 = arith.constant 768 : index
    %89 = vector.load %arg2[%c0_28, %c768] : memref<2x1024xf32, #tpu.memory_space<vmem>>, vector<2x128xf32>
    %cst_29 = arith.constant 0.949999988 : f32
    %90 = vector.broadcast %cst_29 : f32 to vector<2x128xf32>
    %91 = arith.mulf %89, %90 : vector<2x128xf32>
    %cst_30 = arith.constant 2.500000e-02 : f32
    %92 = vector.broadcast %cst_30 : f32 to vector<2x128xf32>
    %93 = arith.addf %91, %92 : vector<2x128xf32>
    %94 = math.log %93 : vector<2x128xf32>
    %cst_31 = arith.constant 1.000000e+00 : f32
    %95 = vector.broadcast %cst_31 : f32 to vector<2x128xf32>
    %96 = arith.subf %95, %93 : vector<2x128xf32>
    %97 = math.log %96 : vector<2x128xf32>
    %98 = arith.subf %94, %97 : vector<2x128xf32>
    %99 = arith.mulf %98, %98 : vector<2x128xf32>
    %100 = arith.addf %86, %99 : vector<2x128xf32>
    %101 = arith.addf %94, %97 : vector<2x128xf32>
    %102 = arith.subf %88, %101 : vector<2x128xf32>
    %c0_32 = arith.constant 0 : index
    %c896 = arith.constant 896 : index
    %103 = vector.load %arg2[%c0_32, %c896] : memref<2x1024xf32, #tpu.memory_space<vmem>>, vector<2x128xf32>
    %cst_33 = arith.constant 0.949999988 : f32
    %104 = vector.broadcast %cst_33 : f32 to vector<2x128xf32>
    %105 = arith.mulf %103, %104 : vector<2x128xf32>
    %cst_34 = arith.constant 2.500000e-02 : f32
    %106 = vector.broadcast %cst_34 : f32 to vector<2x128xf32>
    %107 = arith.addf %105, %106 : vector<2x128xf32>
    %108 = math.log %107 : vector<2x128xf32>
    %cst_35 = arith.constant 1.000000e+00 : f32
    %109 = vector.broadcast %cst_35 : f32 to vector<2x128xf32>
    %110 = arith.subf %109, %107 : vector<2x128xf32>
    %111 = math.log %110 : vector<2x128xf32>
    %112 = arith.subf %108, %111 : vector<2x128xf32>
    %113 = arith.mulf %112, %112 : vector<2x128xf32>
    %114 = arith.addf %100, %113 : vector<2x128xf32>
    %115 = arith.addf %108, %111 : vector<2x128xf32>
    %116 = arith.subf %102, %115 : vector<2x128xf32>
    %c0_36 = arith.constant 0 : index
    %c0_37 = arith.constant 0 : index
    %117 = vector.load %arg4[%c0_36, %c0_37] : memref<2x128xf32, #tpu.memory_space<vmem>>, vector<2x128xf32>
    tpu.vector_store %arg4[%c0_36, %c0_37], %114 {strides = array<i32>} : memref<2x128xf32, #tpu.memory_space<vmem>>, vector<2x128xf32>,
    %c0_38 = arith.constant 0 : index
    %c0_39 = arith.constant 0 : index
    %118 = vector.load %arg5[%c0_38, %c0_39] : memref<2x128xf32, #tpu.memory_space<vmem>>, vector<2x128xf32>
    tpu.vector_store %arg5[%c0_38, %c0_39], %116 {strides = array<i32>} : memref<2x128xf32, #tpu.memory_space<vmem>>, vector<2x128xf32>,
    %c0_i32_40 = arith.constant 0 : i32
    %119 = arith.cmpi eq, %arg1, %c0_i32_40 : i32
    %120 = arith.extui %119 : i1 to i32
    %c0_i32_41 = arith.constant 0 : i32
    %121 = arith.cmpi ne, %120, %c0_i32_41 : i32
    scf.if %121 {
      %cst_42 = arith.constant dense<0.000000e+00> : vector<2xf32>
      %122 = vector.multi_reduction <add>, %114, %cst_42 [1] : vector<2x128xf32> to vector<2xf32>
      %123 = vector.shape_cast %122 : vector<2xf32> to vector<2x1xf32>
      %cst_43 = arith.constant dense<0.000000e+00> : vector<2xf32>
      %124 = vector.multi_reduction <add>, %116, %cst_43 [1] : vector<2x128xf32> to vector<2xf32>
      %125 = vector.shape_cast %124 : vector<2xf32> to vector<2x1xf32>
      %cst_44 = arith.constant -5.000000e-01 : f32
      %126 = vector.broadcast %cst_44 : f32 to vector<2x1xf32>
      %127 = arith.mulf %126, %123 : vector<2x1xf32>
      %128 = arith.addf %127, %125 : vector<2x1xf32>
      %cst_45 = arith.constant -993.517395 : f32
      %129 = vector.broadcast %cst_45 : f32 to vector<2x1xf32>
      %130 = arith.addf %128, %129 : vector<2x1xf32>
      %131 = vector.shape_cast %130 : vector<2x1xf32> to vector<2x1xf32>
      %132 = vector.broadcast %131 : vector<2x1xf32> to vector<2x128xf32>
      %c0_46 = arith.constant 0 : index
      %c0_47 = arith.constant 0 : index
      %133 = vector.load %arg3[%c0_46, %c0_47] : memref<2x128xf32, #tpu.memory_space<vmem>>, vector<2x128xf32>
      tpu.vector_store %arg3[%c0_46, %c0_47], %132 {strides = array<i32>} : memref<2x128xf32, #tpu.memory_space<vmem>>, vector<2x128xf32>,
    } else {
    }
    return
  }
  func.func @transform_0(%arg0: i32, %arg1: i32) -> (i32, i32) {
    %c0_i32 = arith.constant 0 : i32
    return %arg0, %arg1 : i32, i32
  }
  func.func @transform_1(%arg0: i32, %arg1: i32) -> (i32, i32) {
    %c0_i32 = arith.constant 0 : i32
    %c0_i32_0 = arith.constant 0 : i32
    return %arg0, %c0_i32 : i32, i32
  }
}

</mosaic_0001>

<llo_original>
// kernel: realnvp_log_prob.1
$region0: #{realnvp_log_prob.1}
  #allocation0 [shape = 'u32[]', space=smem, size = 0x4, offset = 0x4, fixed_abs, tag = 'smem constant byte address 0x4 - core index']
  #allocation1 [shape = 'u32[144,128]{1,0:T(1,128)}', space=vmem, size = 0x12000, scoped, tag = 'internal scratch']
  #allocation2 [shape = 'f32[2,128]{1,0:T(2,128)}', space=vmem, size = 0x400, scoped, tag = 'scratch operand']
  #allocation3 [shape = 'f32[2,128]{1,0:T(2,128)}', space=vmem, size = 0x400, scoped, tag = 'scratch operand']
  %s0 = inlined_call_operand.vmem [shape: f32[2,1024], index: 0, kind: input, shape index: {}]
  %s1 = inlined_call_operand.vmem [shape: f32[2,128], index: 1, kind: output, shape index: {}]
  %s2 = sld [smem:[#allocation0]]
  $region22: #{realnvp_log_prob.1} parent=0
    _
  %s4 = ssub.s32 1, %s2
  %s5 = scalar_select 0, %s4, %s2
  // Predicated region
  $region2: #{realnvp_log_prob.1} parent=0 // pred_check
    _
  $region3: #{realnvp_log_prob.1} parent=0 // pred_check_branch
    %7 = sbr.rel (0) target = $region5
  $region4: #{realnvp_log_prob.1} parent=0 // pred_region
    _
  $region5: #{realnvp_log_prob.1} parent=0 // pred_fallthru
    _
  %p8 = scmp.eq.s32.totalorder 0, 0
  // Predicated region
  $region6: #{realnvp_log_prob.1} parent=0 // pred_check
    %p9 = pneg %p8
  $region7: #{realnvp_log_prob.1} parent=0 // pred_check_branch
    %11 = sbr.rel (%p9) target = $region9
  $region8: #{realnvp_log_prob.1} parent=0 // pred_region
    %12 = vst [vmem:[#allocation2] sm:$0x3] 0.0
    %13 = vst [vmem:[#allocation3] sm:$0x3] 0.0
  $region9: #{realnvp_log_prob.1} parent=0 // pred_fallthru
    _
  %v14 = vld [vmem:[#allocation2] sm:$0x3]
  %v15 = vld [vmem:[#allocation3] sm:$0x3]
  %v16 = vld [vmem:[%s0] sm:$0x3]
  %v17 = vmul.f32 %v16, 0.95
  %v18 = vadd.f32 %v17, 0.025
  %v19 = vlog2.pop %v18
  %v20 = vmul.f32 %v19, 0.6931472
  %v21 = vsub.f32 1.0, %v18
  %v22 = vlog2.pop %v21
  %v23 = vmul.f32 %v22, 0.6931472
  %v24 = vsub.f32 %v20, %v23
  %v25 = vmul.f32 %v24, %v24
  %v26 = vadd.f32 %v14, %v25
  %v27 = vadd.f32 %v20, %v23
  %v28 = vsub.f32 %v15, %v27
  %v29 = vld [vmem:[%s0 + $0x2] sm:$0x3]
  %v30 = vmul.f32 %v29, 0.95
  %v31 = vadd.f32 %v30, 0.025
  %v32 = vlog2.pop %v31
  %v33 = vmul.f32 %v32, 0.6931472
  %v34 = vsub.f32 1.0, %v31
  %v35 = vlog2.pop %v34
  %v36 = vmul.f32 %v35, 0.6931472
  %v37 = vsub.f32 %v33, %v36
  %v38 = vmul.f32 %v37, %v37
  %v39 = vadd.f32 %v26, %v38
  %v40 = vadd.f32 %v33, %v36
  %v41 = vsub.f32 %v28, %v40
  %v42 = vld [vmem:[%s0 + $0x4] sm:$0x3]
  %v43 = vmul.f32 %v42, 0.95
  %v44 = vadd.f32 %v43, 0.025
  %v45 = vlog2.pop %v44
  %v46 = vmul.f32 %v45, 0.6931472
  %v47 = vsub.f32 1.0, %v44
  %v48 = vlog2.pop %v47
  %v49 = vmul.f32 %v48, 0.6931472
  %v50 = vsub.f32 %v46, %v49
  %v51 = vmul.f32 %v50, %v50
  %v52 = vadd.f32 %v39, %v51
  %v53 = vadd.f32 %v46, %v49
  %v54 = vsub.f32 %v41, %v53
  %v55 = vld [vmem:[%s0 + $0x6] sm:$0x3]
  %v56 = vmul.f32 %v55, 0.95
  %v57 = vadd.f32 %v56, 0.025
  %v58 = vlog2.pop %v57
  %v59 = vmul.f32 %v58, 0.6931472
  %v60 = vsub.f32 1.0, %v57
  %v61 = vlog2.pop %v60
  %v62 = vmul.f32 %v61, 0.6931472
  %v63 = vsub.f32 %v59, %v62
  %v64 = vmul.f32 %v63, %v63
  %v65 = vadd.f32 %v52, %v64
  %v66 = vadd.f32 %v59, %v62
  %v67 = vsub.f32 %v54, %v66
  %v68 = vld [vmem:[%s0 + $0x8] sm:$0x3]
  %v69 = vmul.f32 %v68, 0.95
  %v70 = vadd.f32 %v69, 0.025
  %v71 = vlog2.pop %v70
  %v72 = vmul.f32 %v71, 0.6931472
  %v73 = vsub.f32 1.0, %v70
  %v74 = vlog2.pop %v73
  %v75 = vmul.f32 %v74, 0.6931472
  %v76 = vsub.f32 %v72, %v75
  %v77 = vmul.f32 %v76, %v76
  %v78 = vadd.f32 %v65, %v77
  %v79 = vadd.f32 %v72, %v75
  %v80 = vsub.f32 %v67, %v79
  %v81 = vld [vmem:[%s0 + $0xa] sm:$0x3]
  %v82 = vmul.f32 %v81, 0.95
  %v83 = vadd.f32 %v82, 0.025
  %v84 = vlog2.pop %v83
  %v85 = vmul.f32 %v84, 0.6931472
  %v86 = vsub.f32 1.0, %v83
  %v87 = vlog2.pop %v86
  %v88 = vmul.f32 %v87, 0.6931472
  %v89 = vsub.f32 %v85, %v88
  %v90 = vmul.f32 %v89, %v89
  %v91 = vadd.f32 %v78, %v90
  %v92 = vadd.f32 %v85, %v88
  %v93 = vsub.f32 %v80, %v92
  %v94 = vld [vmem:[%s0 + $0xc] sm:$0x3]
  %v95 = vmul.f32 %v94, 0.95
  %v96 = vadd.f32 %v95, 0.025
  %v97 = vlog2.pop %v96
  %v98 = vmul.f32 %v97, 0.6931472
  %v99 = vsub.f32 1.0, %v96
  %v100 = vlog2.pop %v99
  %v101 = vmul.f32 %v100, 0.6931472
  %v102 = vsub.f32 %v98, %v101
  %v103 = vmul.f32 %v102, %v102
  %v104 = vadd.f32 %v91, %v103
  %v105 = vadd.f32 %v98, %v101
  %v106 = vsub.f32 %v93, %v105
  %v107 = vld [vmem:[%s0 + $0xe] sm:$0x3]
  %v108 = vmul.f32 %v107, 0.95
  %v109 = vadd.f32 %v108, 0.025
  %v110 = vlog2.pop %v109
  %v111 = vmul.f32 %v110, 0.6931472
  %v112 = vsub.f32 1.0, %v109
  %v113 = vlog2.pop %v112
  %v114 = vmul.f32 %v113, 0.6931472
  %v115 = vsub.f32 %v111, %v114
  %v116 = vmul.f32 %v115, %v115
  %v117 = vadd.f32 %v104, %v116
  %v118 = vadd.f32 %v111, %v114
  %v119 = vsub.f32 %v106, %v118
  %120 = vst [vmem:[#allocation2] sm:$0x3] %v117
  %121 = vst [vmem:[#allocation3] sm:$0x3] %v119
  // Predicated region
  $region10: #{realnvp_log_prob.1} parent=0 // pred_check
    %p122 = pneg %p8
  $region11: #{realnvp_log_prob.1} parent=0 // pred_check_branch
    %124 = sbr.rel (%p122) target = $region13
  $region12: #{realnvp_log_prob.1} parent=0 // pred_region
    %vm125 = vcmask 1041408
    %v126 = vsel %vm125, %v117, 0.0
    %127 = vadd.xlane.f32.xlu0 %v126
    %v128 = vpop.xlane.xlu0 %127
    %v129 = vsel %vm125, %v119, 0.0
    %130 = vadd.xlane.f32.xlu0 %v129
    %v131 = vpop.xlane.xlu0 %130
    %v132 = vmul.f32 %v128, -0.5
    %v133 = vadd.f32 %v132, %v131
    %v134 = vadd.f32 %v133, -993.5174
    %135 = vst [vmem:[%s1] sm:$0x3] %v134
  $region13: #{realnvp_log_prob.1} parent=0 // pred_fallthru
    _
  // Predicated region
  $region14: #{realnvp_log_prob.1} parent=0 // pred_check
    _
  $region15: #{realnvp_log_prob.1} parent=0 // pred_check_branch
    %137 = sbr.rel (0) target = $region17
  $region16: #{realnvp_log_prob.1} parent=0 // pred_region
    _
  $region17: #{realnvp_log_prob.1} parent=0 // pred_fallthru
    _
  // Predicated region
  $region18: #{realnvp_log_prob.1} parent=0 // pred_check
    _
  $region19: #{realnvp_log_prob.1} parent=0 // pred_check_branch
    %139 = sbr.rel (0) target = $region21
  $region20: #{realnvp_log_prob.1} parent=0 // pred_region
    _
  $region21: #{realnvp_log_prob.1} parent=0 // pred_fallthru
    _

</llo_original>
